<compile_context>
chip_gen: v5e
topology: v5e:2x2
jax: 0.10.0
libtpu: 0.0.40
codegen_flags: <defaults>
</compile_context>

<pallas_src>
import functools

import jax
import jax.numpy as jnp
from jax.experimental import pallas as pl
from jax.experimental.pallas import tpu as pltpu


def _ce2d_kernel(logits_ref, tgt_ref, out_ref, *, ignore_index, hw):
    j = pl.program_id(1)

    x = logits_ref[0]                               # (C, T): classes on sublanes, pixels on lanes
    # Keep elementwise work in bf16 when the input is bf16 (v6e/v7x VPU/EUP
    # are bf16-native; halves VALU/EUP traffic and the VMEM temporaries).
    # Any other float dtype is upcast to f32. Accumulations are always f32.
    if x.dtype != jnp.bfloat16:
        x = x.astype(jnp.float32)
    t = tgt_ref[0]                                  # (1, T) int32
    C, T = x.shape

    # numerically stable log-sum-exp over the class (sublane) axis
    m = jnp.max(x, axis=0, keepdims=True)                              # (1, T) compute dtype
    e = jnp.exp(x - m)                                                 # EUP (bf16 on bf16 path)
    se = jnp.sum(e, axis=0, keepdims=True, dtype=jnp.float32)          # (1, T) f32 accumulate
    lse = m.astype(jnp.float32) + jnp.log(se)                          # (1, T) f32

    # gather x[target, pixel] via compare against a (C,1) class iota
    # (broadcast; no (C,T) int32 iota temporary per step).
    # TODO(synk): non-ignored targets outside [0, C) silently contribute
    # x_tgt=0 (PyTorch treats them as an error); no bounds check is emitted.
    cls = jax.lax.broadcasted_iota(jnp.int32, (C, 1), 0)                # (C, 1)
    sel = jnp.where(cls == t, x, jnp.zeros((), x.dtype))                # (C, T)
    x_tgt = jnp.sum(sel, axis=0, keepdims=True, dtype=jnp.float32)      # (1, T)

    # validity: not ignore_index and inside the true spatial extent (ragged tail)
    pix = j * T + jax.lax.broadcasted_iota(jnp.int32, t.shape, 1)       # (1, T)
    valid = jnp.logical_and(t != ignore_index, pix < hw)                # (1, T)

    per_pixel = jnp.where(valid, lse - x_tgt, 0.0)                      # NLL of log_softmax
    s = jnp.sum(per_pixel)
    c = jnp.sum(valid.astype(jnp.float32))

    # single packed output block: sublane 0 = loss sum, sublane 1 = valid count
    row = jax.lax.broadcasted_iota(jnp.int32, out_ref.shape, 2)         # (1,1,2,128)
    out_ref[...] = jnp.where(row == 0, s, c)


def _choose_tile_hw(C, HW, itemsize, n_batch, *,
                    target_block_bytes=2 * 1024 * 1024, min_grid_steps=8):
    """Pixel (lane) tile targeting a ~2 MiB logits block (accounting for
    sublane padding of C), while keeping enough total grid steps for v7x
    megacore sharding and DMA/compute overlap on all generations."""
    sublane_mult = max(8, 32 // max(1, itemsize))       # 8 f32 / 16 bf16 / 32 i8
    c_pad = ((C + sublane_mult - 1) // sublane_mult) * sublane_mult

    t = target_block_bytes // max(1, c_pad * itemsize)
    t = max(128, (t // 128) * 128)

    # ensure >= min_grid_steps total grid steps when the spatial extent allows
    if n_batch * pl.cdiv(HW, t) < min_grid_steps:
        want = -(-HW * n_batch // min_grid_steps)       # ceil(HW*N / min_steps)
        want = max(128, (want // 128) * 128)
        t = min(t, want)

    if t >= HW:
        return HW                    # single full-extent block (no 128 constraint)
    return t                         # partial blocks: lane dim is 128-aligned


def cross_entropy_loss_2d(inputs, targets, *, ignore_index=-1, tile_hw=None):
    """inputs: [N, C, H, W] float logits (f32 or bf16); targets: [N, H, W] int
    class ids (ignore_index entries skipped). Returns scalar mean loss (f32)."""
    N, C, H, W = inputs.shape
    HW = H * W

    logits = inputs.reshape(N, C, HW)                     # metadata-only reshape
    tgt = targets.reshape(N, 1, HW).astype(jnp.int32)     # tiny array

    in_dtype = jnp.dtype(inputs.dtype)
    itemsize = in_dtype.itemsize
    if tile_hw is None:
        tile_hw = _choose_tile_hw(C, HW, itemsize, N)
    else:
        tile_hw = int(tile_hw)
        if tile_hw >= HW:
            tile_hw = HW
        else:
            tile_hw = max(128, (tile_hw // 128) * 128)
            if tile_hw >= HW:
                tile_hw = HW
    n_hw_tiles = pl.cdiv(HW, tile_hw)

    # --- VMEM budget (sublane padding + in-kernel temporaries included) ---
    sublane_mult = max(8, 32 // max(1, itemsize))
    c_pad = ((C + sublane_mult - 1) // sublane_mult) * sublane_mult
    compute_itemsize = itemsize if in_dtype == jnp.bfloat16 else 4
    logits_block = c_pad * tile_hw * itemsize             # padded (C, T) input block
    tgt_block = 8 * tile_hw * 4                           # (1, T) int32, padded sublanes
    out_block = 8 * 128 * 4                               # (2,128) f32, padded sublanes
    pipeline_bytes = 2 * (logits_block + tgt_block + out_block)   # double-buffered
    # ~4 block-sized compute-dtype temporaries (x-m, exp, compare, select)
    # + ~2 f32 block-sized buffers for the f32 accumulation path
    temp_bytes = 4 * c_pad * tile_hw * compute_itemsize + 2 * c_pad * tile_hw * 4
    vmem_limit = int(min(48 * 1024 * 1024,                # headroom on v7x (64 MiB phys)
                         max(32 * 1024 * 1024,
                             pipeline_bytes + temp_bytes + (4 << 20))))

    out = pl.pallas_call(
        functools.partial(_ce2d_kernel, ignore_index=ignore_index, hw=HW),
        out_shape=jax.ShapeDtypeStruct((N, n_hw_tiles, 2, 128), jnp.float32),
        grid_spec=pltpu.PrefetchScalarGridSpec(
            num_scalar_prefetch=0,
            grid=(N, n_hw_tiles),
            in_specs=[
                pl.BlockSpec((1, C, tile_hw), lambda n, j: (n, 0, j)),
                pl.BlockSpec((1, 1, tile_hw), lambda n, j: (n, 0, j)),
            ],
            out_specs=pl.BlockSpec((1, 1, 2, 128), lambda n, j: (n, j, 0, 0)),
        ),
        compiler_params=pltpu.CompilerParams(
            dimension_semantics=("parallel", "parallel"),
            vmem_limit_bytes=vmem_limit,
        ),
    )(logits, tgt)

    loss_sum = jnp.sum(out[:, :, 0, 0])
    # per-tile counts are exact integers in f32 (tile_hw << 2^24); cast to
    # int32 before the global sum so the denominator stays exact.
    valid_cnt = jnp.sum(out[:, :, 1, 0].astype(jnp.int32)).astype(jnp.float32)
    return loss_sum / valid_cnt


def _reference(inputs, targets, ignore_index=-1):
    # plain-JAX reference for sanity checking (f32 math)
    logp = jax.nn.log_softmax(inputs.astype(jnp.float32), axis=1)  # [N,C,H,W]
    t = targets.astype(jnp.int32)
    valid = t != ignore_index
    t_safe = jnp.where(valid, t, 0)
    picked = jnp.take_along_axis(logp, t_safe[:, None, :, :], axis=1)[:, 0]  # [N,H,W]
    loss = jnp.where(valid, -picked, 0.0)
    return jnp.sum(loss) / jnp.sum(valid.astype(jnp.float32))


# TODO(synk): optional per-class `weight` tensor of nn.NLLLoss is not implemented
# (the module's default weight=None path is what is reproduced here).

if __name__ == "__main__":
    key = jax.random.PRNGKey(0)
    keys = jax.random.split(key, 9)

    # Case 1: small f32 shapes; auto tile -> 128-lane tiles, grid (2, 2).
    N, C, H, W = 2, 4, 16, 16
    x = jax.random.normal(keys[0], (N, C, H, W), dtype=jnp.float32)
    t = jax.random.randint(keys[1], (N, H, W), 0, C, dtype=jnp.int32)
    t = jnp.where(jax.random.bernoulli(keys[2], 0.1, (N, H, W)), -1, t)

    loss = jax.block_until_ready(cross_entropy_loss_2d(x, t, ignore_index=-1))
    ref = _reference(x, t, ignore_index=-1)
    assert jnp.allclose(loss, ref, rtol=1e-5, atol=1e-5), (loss, ref)

    # Case 2: multi-tile grid with a ragged spatial tail (exercises the
    # in-kernel bounds mask that replaces host-side jnp.pad).
    N2, C2, H2, W2 = 2, 4, 16, 20   # HW = 320, tile_hw=128 -> blocks 128/128/64
    x2 = jax.random.normal(keys[3], (N2, C2, H2, W2), dtype=jnp.float32)
    t2 = jax.random.randint(keys[4], (N2, H2, W2), 0, C2, dtype=jnp.int32)
    t2 = jnp.where(jax.random.bernoulli(keys[5], 0.1, (N2, H2, W2)), -1, t2)

    loss2 = jax.block_until_ready(
        cross_entropy_loss_2d(x2, t2, ignore_index=-1, tile_hw=128))
    ref2 = _reference(x2, t2, ignore_index=-1)
    assert jnp.allclose(loss2, ref2, rtol=1e-5, atol=1e-5), (loss2, ref2)

    # Case 3: bf16 logits, single image (exercises the bf16 elementwise path
    # and the >=8-step spatial split for megacore).
    N3, C3, H3, W3 = 1, 8, 32, 32
    x3 = jax.random.normal(keys[6], (N3, C3, H3, W3), dtype=jnp.float32)
    x3 = x3.astype(jnp.bfloat16)
    t3 = jax.random.randint(keys[7], (N3, H3, W3), 0, C3, dtype=jnp.int32)
    t3 = jnp.where(jax.random.bernoulli(keys[8], 0.1, (N3, H3, W3)), -1, t3)

    loss3 = jax.block_until_ready(cross_entropy_loss_2d(x3, t3, ignore_index=-1))
    ref3 = _reference(x3, t3, ignore_index=-1)
    assert jnp.allclose(loss3, ref3, rtol=3e-2, atol=3e-2), (loss3, ref3)

    print("KERNEL_OK")
</pallas_src>

<mosaic_0001>
module attributes {stable_mosaic.version = 11 : i64} {
  func.func @_ce2d_kernel(%arg0: i32, %arg1: i32, %arg2: memref<1x4x128xf32, #tpu.memory_space<vmem>>, %arg3: memref<1x1x128xi32, #tpu.memory_space<vmem>>, %arg4: memref<1x1x2x128xf32, #tpu.memory_space<vmem>>) attributes {dimension_semantics = [#tpu.dimension_semantics<parallel>, #tpu.dimension_semantics<parallel>], iteration_bounds = array<i64: 2, 2>, scalar_prefetch = 0 : i64, scratch_operands = 0 : i64, tpu.core_type = #tpu.core_type<tc>, window_params = [{transform_indices = @transform_0, window_bounds = array<i64: 1, 4, 128>}, {transform_indices = @transform_1, window_bounds = array<i64: 1, 1, 128>}, {transform_indices = @transform_2, window_bounds = array<i64: 1, 1, 2, 128>}]} {
    %c0 = arith.constant 0 : index
    %c0_0 = arith.constant 0 : index
    %c0_1 = arith.constant 0 : index
    %0 = vector.load %arg2[%c0, %c0_0, %c0_1] : memref<1x4x128xf32, #tpu.memory_space<vmem>>, vector<1x4x128xf32>
    %1 = vector.shape_cast %0 : vector<1x4x128xf32> to vector<4x128xf32>
    %c0_2 = arith.constant 0 : index
    %c0_3 = arith.constant 0 : index
    %c0_4 = arith.constant 0 : index
    %2 = vector.load %arg3[%c0_2, %c0_3, %c0_4] : memref<1x1x128xi32, #tpu.memory_space<vmem>>, vector<1x1x128xi32>
    %3 = vector.shape_cast %2 : vector<1x1x128xi32> to vector<1x128xi32>
    %cst = arith.constant dense<0xFF800000> : vector<128xf32>
    %4 = vector.multi_reduction <maximumf>, %1, %cst [0] : vector<4x128xf32> to vector<128xf32>
    %5 = vector.shape_cast %4 : vector<128xf32> to vector<1x128xf32>
    %6 = vector.broadcast %5 : vector<1x128xf32> to vector<4x128xf32>
    %7 = arith.subf %1, %6 : vector<4x128xf32>
    %8 = math.exp %7 : vector<4x128xf32>
    %cst_5 = arith.constant dense<0.000000e+00> : vector<128xf32>
    %9 = vector.multi_reduction <add>, %8, %cst_5 [0] : vector<4x128xf32> to vector<128xf32>
    %10 = vector.shape_cast %9 : vector<128xf32> to vector<1x128xf32>
    %11 = math.log %10 : vector<1x128xf32>
    %12 = arith.addf %5, %11 : vector<1x128xf32>
    %13 = tpu.iota {dimensions = array<i32: 0>} : vector<4x1xi32>
    %14 = vector.broadcast %13 : vector<4x1xi32> to vector<4x128xi32>
    %15 = vector.broadcast %3 : vector<1x128xi32> to vector<4x128xi32>
    %16 = arith.cmpi eq, %14, %15 : vector<4x128xi32>
    %cst_6 = arith.constant 0.000000e+00 : f32
    %17 = vector.broadcast %cst_6 : f32 to vector<4x128xf32>
    %18 = arith.select %16, %1, %17 : vector<4x128xi1>, vector<4x128xf32>
    %cst_7 = arith.constant dense<0.000000e+00> : vector<128xf32>
    %19 = vector.multi_reduction <add>, %18, %cst_7 [0] : vector<4x128xf32> to vector<128xf32>
    %20 = vector.shape_cast %19 : vector<128xf32> to vector<1x128xf32>
    %c128_i32 = arith.constant 128 : i32
    %21 = arith.muli %arg1, %c128_i32 : i32
    %22 = tpu.iota {dimensions = array<i32: 1>} : vector<1x128xi32>
    %23 = vector.broadcast %21 : i32 to vector<1x128xi32>
    %24 = arith.addi %23, %22 : vector<1x128xi32>
    %c-1_i32 = arith.constant -1 : i32
    %25 = vector.broadcast %c-1_i32 : i32 to vector<1x128xi32>
    %26 = arith.cmpi ne, %3, %25 : vector<1x128xi32>
    %c256_i32 = arith.constant 256 : i32
    %27 = vector.broadcast %c256_i32 : i32 to vector<1x128xi32>
    %28 = arith.cmpi slt, %24, %27 : vector<1x128xi32>
    %29 = arith.andi %26, %28 : vector<1x128xi1>
    %30 = arith.subf %12, %20 : vector<1x128xf32>
    %cst_8 = arith.constant 0.000000e+00 : f32
    %31 = vector.broadcast %cst_8 : f32 to vector<1x128xf32>
    %32 = arith.select %29, %30, %31 : vector<1x128xi1>, vector<1x128xf32>
    %33 = vector.shape_cast %32 : vector<1x128xf32> to vector<1x1x128xf32>
    %cst_9 = arith.constant dense<0.000000e+00> : vector<1xf32>
    %34 = vector.multi_reduction <add>, %33, %cst_9 [1, 2] : vector<1x1x128xf32> to vector<1xf32>
    %35 = vector.shape_cast %34 : vector<1xf32> to vector<1x1x1xf32>
    %36 = vector.extract %35[0, 0, 0] : f32 from vector<1x1x1xf32>
    %37 = arith.extui %29 : vector<1x128xi1> to vector<1x128xi32>
    %38 = arith.sitofp %37 : vector<1x128xi32> to vector<1x128xf32>
    %39 = vector.shape_cast %38 : vector<1x128xf32> to vector<1x1x128xf32>
    %cst_10 = arith.constant dense<0.000000e+00> : vector<1xf32>
    %40 = vector.multi_reduction <add>, %39, %cst_10 [1, 2] : vector<1x1x128xf32> to vector<1xf32>
    %41 = vector.shape_cast %40 : vector<1xf32> to vector<1x1x1xf32>
    %42 = vector.extract %41[0, 0, 0] : f32 from vector<1x1x1xf32>
    %43 = tpu.iota {dimensions = array<i32: 2>} : vector<1x1x2x128xi32>
    %c0_i32 = arith.constant 0 : i32
    %44 = vector.broadcast %c0_i32 : i32 to vector<1x1x2x128xi32>
    %45 = arith.cmpi eq, %43, %44 : vector<1x1x2x128xi32>
    %46 = vector.broadcast %36 : f32 to vector<1x1x2x128xf32>
    %47 = vector.broadcast %42 : f32 to vector<1x1x2x128xf32>
    %48 = arith.select %45, %46, %47 : vector<1x1x2x128xi1>, vector<1x1x2x128xf32>
    %c0_11 = arith.constant 0 : index
    %c0_12 = arith.constant 0 : index
    %c0_13 = arith.constant 0 : index
    %c0_14 = arith.constant 0 : index
    %49 = vector.load %arg4[%c0_11, %c0_12, %c0_13, %c0_14] : memref<1x1x2x128xf32, #tpu.memory_space<vmem>>, vector<1x1x2x128xf32>
    tpu.vector_store %arg4[%c0_11, %c0_12, %c0_13, %c0_14], %48 {strides = array<i32>} : memref<1x1x2x128xf32, #tpu.memory_space<vmem>>, vector<1x1x2x128xf32>,
    return
  }
  func.func @transform_0(%arg0: i32, %arg1: i32) -> (i32, i32, i32) {
    %c0_i32 = arith.constant 0 : i32
    %c0_i32_0 = arith.constant 0 : i32
    return %arg0, %c0_i32, %arg1 : i32, i32, i32
  }
  func.func @transform_1(%arg0: i32, %arg1: i32) -> (i32, i32, i32) {
    %c0_i32 = arith.constant 0 : i32
    %c0_i32_0 = arith.constant 0 : i32
    return %arg0, %c0_i32, %arg1 : i32, i32, i32
  }
  func.func @transform_2(%arg0: i32, %arg1: i32) -> (i32, i32, i32, i32) {
    %c0_i32 = arith.constant 0 : i32
    %c0_i32_0 = arith.constant 0 : i32
    %c0_i32_1 = arith.constant 0 : i32
    return %arg0, %arg1, %c0_i32, %c0_i32_0 : i32, i32, i32, i32
  }
}

</mosaic_0001>

<llo_original>
// kernel: tpu_custom_call.1
$region0: #{tpu_custom_call.1}
  #allocation0 [shape = 'u32[]', space=smem, size = 0x4, offset = 0x4, fixed_abs, tag = 'smem constant byte address 0x4 - core index']
  #allocation1 [shape = 'u32[72,128]{1,0:T(1,128)}', space=vmem, size = 0x9000, scoped, tag = 'internal scratch']
  %s0 = inlined_call_operand.hbm [shape: f32[2,4,256], index: 0, kind: input, shape index: {}]
  %s1 = inlined_call_operand.hbm [shape: s32[2,1,256], index: 1, kind: input, shape index: {}]
  %s2 = inlined_call_operand.hbm [shape: f32[2,2,2,128], index: 2, kind: output, shape index: {}]
  %s3 = sld [smem:[#allocation0]]
  $region49: #{tpu_custom_call.1} parent=0
    _
  %s5 = ssub.s32 1, %s3
  %s6 = scalar_select 0, %s5, %s3
  $region1: #{tpu_custom_call.1} parent=0
    #allocation2 [shape = 'u8[4096]{0}', space=vmem, size = 0x1000, scoped, tag = 'input window, operand 0']
    #allocation3 [shape = 's32[2]{0}', space=sflag, size = 0x8, scoped, tag = 'scoped memory for tpu_custom_call.1']
    #allocation4 [shape = 's32[2]{0}', space=sflag, size = 0x8, scoped, tag = 'scoped memory for tpu_custom_call.1']
    #allocation5 [shape = 'u8[1024]{0}', space=vmem, size = 0x400, scoped, tag = 'input window, operand 1']
    #allocation6 [shape = 's32[2]{0}', space=sflag, size = 0x8, scoped, tag = 'scoped memory for tpu_custom_call.1']
    #allocation7 [shape = 'u8[2048]{0}', space=vmem, size = 0x800, scoped, tag = 'output window, operand 0']
    %7 = vsyncpa [#allocation3], 0
    %s8 = scalar_lea.sflag [#allocation3], 1
    %9 = vsyncpa %s8, 0
    %10 = vsyncpa [#allocation6], 0
    %s11 = scalar_lea.sflag [#allocation6], 1
    %12 = vsyncpa %s11, 0
    %13 = vsyncpa [#allocation4], 0
    %s14 = scalar_lea.sflag [#allocation4], 1
    %15 = vsyncpa %s14, 0
    loop: start=0, step=1, limit=6
    $region2: #{tpu_custom_call.1} parent=1 // loop_pre_header
      _
    $region3: #{tpu_custom_call.1} parent=1 // loop_header
      %s17 = sphi 0, %s21
      %p18 = scmp.ge.s32.totalorder %s17, 6
      %s24 = sphi 0, %s36
      %s25 = sphi 0, %s32
      %s26 = sphi 0, %s24
      %s27 = sphi 0, %s25
      %s28 = sphi 0, %s26
      %s29 = sphi 0, %s27
      %s41 = sphi 0, %s43
      %s44 = sphi 0, %s41
      %s45 = sphi 0, %s44
      %s61 = sphi 0, %s45
      %s69 = sphi 0, %s71
      %s72 = sphi 0, %s69
      %s73 = sphi 0, %s72
      %s89 = sphi 0, %s73
      %s97 = sphi 0, %s99
      %s100 = sphi 0, %s97
      %s101 = sphi 0, %s100
      %s117 = sphi 0, %s101
    $region4: #{tpu_custom_call.1} parent=1 // loop_header_branch
      %20 = sbr.rel (%p18) target = $region8
    $region5: #{tpu_custom_call.1} parent=1 // loop_body
      %s22 = ssub.s32 %s17, 1
      %s23 = ssub.s32 %s17, 2
      %s30 = sadd.s32 1, %s25
      %p31 = scmp.ge.s32.totalorder %s30, 2
      %s32 = scalar_select %p31, 0, %s30
      %s33 = sadd.s32 1, %s24
      %s34 = scalar_select %p31, %s33, %s24
      %p35 = scmp.ge.s32.totalorder %s34, 2
      %s36 = scalar_select %p35, 0, %s34
      %s37 = ssub.s32 %s24, %s36
      %s38 = ssub.s32 %s25, %s32
      %s39 = sor.u32 %s37, %s38
      %p40 = scmp.eq.s32.totalorder %s39, 0
      %s42 = sadd.s32 %s41, 1
      %s43 = scalar_select %p40, %s41, %s42
      %p46 = pneg %p40
      %p47 = scmp.eq.s32.totalorder %s17, 3
      %p48 = por %p46, %p47
      %p49 = scmp.ne.s32.totalorder %s41, %s44
      %p50 = scmp.eq.s32.totalorder %s17, 0
      %p51 = por %p49, %p50
      %p52 = scmp.ne.s32.totalorder %s41, %s44
      %p53 = scmp.eq.s32.totalorder %s22, 3
      %p54 = por %p52, %p53
      %p55 = scmp.ne.s32.totalorder %s44, %s45
      %p56 = scmp.eq.s32.totalorder %s22, 0
      %p57 = por %p55, %p56
      %p58 = scmp.ne.s32.totalorder %s44, %s45
      %p59 = scmp.eq.s32.totalorder %s23, 3
      %p60 = por %p58, %p59
      %p62 = scmp.ne.s32.totalorder %s45, %s61
      %p63 = scmp.eq.s32.totalorder %s23, 0
      %p64 = por %p62, %p63
      %s65 = ssub.s32 %s24, %s36
      %s66 = ssub.s32 %s25, %s32
      %s67 = sor.u32 %s65, %s66
      %p68 = scmp.eq.s32.totalorder %s67, 0
      %s70 = sadd.s32 %s69, 1
      %s71 = scalar_select %p68, %s69, %s70
      %p74 = pneg %p68
      %p75 = scmp.eq.s32.totalorder %s17, 3
      %p76 = por %p74, %p75
      %p77 = scmp.ne.s32.totalorder %s69, %s72
      %p78 = scmp.eq.s32.totalorder %s17, 0
      %p79 = por %p77, %p78
      %p80 = scmp.ne.s32.totalorder %s69, %s72
      %p81 = scmp.eq.s32.totalorder %s22, 3
      %p82 = por %p80, %p81
      %p83 = scmp.ne.s32.totalorder %s72, %s73
      %p84 = scmp.eq.s32.totalorder %s22, 0
      %p85 = por %p83, %p84
      %p86 = scmp.ne.s32.totalorder %s72, %s73
      %p87 = scmp.eq.s32.totalorder %s23, 3
      %p88 = por %p86, %p87
      %p90 = scmp.ne.s32.totalorder %s73, %s89
      %p91 = scmp.eq.s32.totalorder %s23, 0
      %p92 = por %p90, %p91
      %s93 = ssub.s32 %s24, %s36
      %s94 = ssub.s32 %s25, %s32
      %s95 = sor.u32 %s93, %s94
      %p96 = scmp.eq.s32.totalorder %s95, 0
      %s98 = sadd.s32 %s97, 1
      %s99 = scalar_select %p96, %s97, %s98
      %p102 = pneg %p96
      %p103 = scmp.eq.s32.totalorder %s17, 3
      %p104 = por %p102, %p103
      %p105 = scmp.ne.s32.totalorder %s97, %s100
      %p106 = scmp.eq.s32.totalorder %s17, 0
      %p107 = por %p105, %p106
      %p108 = scmp.ne.s32.totalorder %s97, %s100
      %p109 = scmp.eq.s32.totalorder %s22, 3
      %p110 = por %p108, %p109
      %p111 = scmp.ne.s32.totalorder %s100, %s101
      %p112 = scmp.eq.s32.totalorder %s22, 0
      %p113 = por %p111, %p112
      %p114 = scmp.ne.s32.totalorder %s100, %s101
      %p115 = scmp.eq.s32.totalorder %s23, 3
      %p116 = por %p114, %p115
      %p118 = scmp.ne.s32.totalorder %s101, %s117
      %p119 = scmp.eq.s32.totalorder %s23, 0
      %p120 = por %p118, %p119
      %p121 = scmp.le.s32.totalorder 1, %s17
      %p122 = scmp.lt.s32.totalorder %s17, 5
      %p123 = pnand %p121, %p122
      %p124 = pneg %p123
      // Predicated region
      $region9: #{tpu_custom_call.1} parent=5 // pred_check
        _
      $region10: #{tpu_custom_call.1} parent=5 // pred_check_branch
        %126 = sbr.rel (%p123) target = $region12
      $region11: #{tpu_custom_call.1} parent=5 // pred_region
        %s127 = ssub.s32 %s17, 1
      $region12: #{tpu_custom_call.1} parent=5 // pred_fallthru
        _
      %p128 = scmp.lt.s32.totalorder %s17, 4
      // Predicated region
      $region13: #{tpu_custom_call.1} parent=5 // pred_check
        %p129 = pneg %p128
      $region14: #{tpu_custom_call.1} parent=5 // pred_check_branch
        %131 = sbr.rel (%p129) target = $region16
      $region15: #{tpu_custom_call.1} parent=5 // pred_region
        // Predicated region
        $region17: #{tpu_custom_call.1} parent=15 // pred_check
          %p132 = pneg %p51
        $region18: #{tpu_custom_call.1} parent=15 // pred_check_branch
          %134 = sbr.rel (%p132) target = $region20
        $region19: #{tpu_custom_call.1} parent=15 // pred_region
          %s135 = sand.u32 %s41, 1
          %s136 = scalar_lea.sflag [#allocation3], %s135
          %s137 = sand.u32 %s41, 1
          %s138 = smul.addr %s137, 4
          %s139 = scalar_lea.vmem [#allocation2], %s138
          %141 = vsyncadd %s136, 0
          %s142 = smul.addr %s24, 2
          %s143 = sadd.s32 %s25, %s142
          %s144 = smul.addr %s143, 4
          %s145 = scalar_lea.hbm %s0, %s144
          %s147 = sshll.u32 %s145, 4
          %s148 = int_to_ptr.hbm [resolvable:$true] %s147
          %s149 = sshll.u32 %s139, 4
          %s150 = int_to_ptr.vmem [resolvable:$true] %s149
          %152 = dma.hbm_to_vmem [thread:$0]  %s148, 64, %s150, %s136
        $region20: #{tpu_custom_call.1} parent=15 // pred_fallthru
          _
        // Predicated region
        $region21: #{tpu_custom_call.1} parent=15 // pred_check
          %p153 = pneg %p79
        $region22: #{tpu_custom_call.1} parent=15 // pred_check_branch
          %155 = sbr.rel (%p153) target = $region24
        $region23: #{tpu_custom_call.1} parent=15 // pred_region
          %s156 = sand.u32 %s69, 1
          %s157 = scalar_lea.sflag [#allocation6], %s156
          %s158 = sand.u32 %s69, 1
          %s159 = scalar_lea.vmem [#allocation5], %s158
          %161 = vsyncadd %s157, 0
          %s162 = smul.addr %s24, 2
          %s163 = sadd.s32 %s25, %s162
          %s164 = scalar_lea.hbm %s1, %s163
          %s166 = sshll.u32 %s164, 4
          %s167 = int_to_ptr.hbm [resolvable:$true] %s166
          %s168 = sshll.u32 %s159, 4
          %s169 = int_to_ptr.vmem [resolvable:$true] %s168
          %171 = dma.hbm_to_vmem [thread:$0]  %s167, 16, %s169, %s157
        $region24: #{tpu_custom_call.1} parent=15 // pred_fallthru
          _
      $region16: #{tpu_custom_call.1} parent=5 // pred_fallthru
        _
      %p172 = scmp.le.s32.totalorder 1, %s17
      %p173 = scmp.lt.s32.totalorder %s17, 5
      %p174 = pnand %p172, %p173
      %p175 = pneg %p174
      // Predicated region
      $region25: #{tpu_custom_call.1} parent=5 // pred_check
        _
      $region26: #{tpu_custom_call.1} parent=5 // pred_check_branch
        %177 = sbr.rel (%p174) target = $region28
      $region27: #{tpu_custom_call.1} parent=5 // pred_region
        %s178 = ssub.s32 %s17, 1
        %s179 = sand.u32 %s44, 1
        %s180 = scalar_lea.sflag [#allocation3], %s179
        %s181 = sand.u32 %s44, 1
        %s182 = smul.addr %s181, 4
        %s183 = scalar_lea.vmem [#allocation2], %s182
        // Predicated region
        $region29: #{tpu_custom_call.1} parent=27 // pred_check
          %p184 = pneg %p57
        $region30: #{tpu_custom_call.1} parent=27 // pred_check_branch
          %186 = sbr.rel (%p184) target = $region32
        $region31: #{tpu_custom_call.1} parent=27 // pred_region
          %188 = dma.done %s180, 64
        $region32: #{tpu_custom_call.1} parent=27 // pred_fallthru
          _
        %s189 = sand.u32 %s72, 1
        %s190 = scalar_lea.sflag [#allocation6], %s189
        %s191 = sand.u32 %s72, 1
        %s192 = scalar_lea.vmem [#allocation5], %s191
        // Predicated region
        $region33: #{tpu_custom_call.1} parent=27 // pred_check
          %p193 = pneg %p85
        $region34: #{tpu_custom_call.1} parent=27 // pred_check_branch
          %195 = sbr.rel (%p193) target = $region36
        $region35: #{tpu_custom_call.1} parent=27 // pred_region
          %197 = dma.done %s190, 16
        $region36: #{tpu_custom_call.1} parent=27 // pred_fallthru
          _
        %s198 = sand.u32 %s44, 1
        %s199 = scalar_lea.sflag [#allocation3], %s198
        %s200 = sand.u32 %s44, 1
        %s201 = smul.addr %s200, 4
        %s202 = scalar_lea.vmem [#allocation2], %s201
        %p203 = pneg %p57
        %p204 = pneg %p54
        %s205 = sand.u32 %s72, 1
        %s206 = scalar_lea.sflag [#allocation6], %s205
        %s207 = sand.u32 %s72, 1
        %s208 = scalar_lea.vmem [#allocation5], %s207
        %p209 = pneg %p85
        %p210 = pneg %p82
        %p211 = pneg %p113
        %p212 = pneg %p110
        %s213 = sand.u32 %s100, 1
        %s214 = scalar_lea.sflag [#allocation4], %s213
        %s215 = sand.u32 %s100, 1
        %s216 = smul.addr %s215, 2
        %s217 = scalar_lea.vmem [#allocation7], %s216
        %v218 = vld [vmem:[%s183] sm:$0xf]
        %v219 = vld [vmem:[%s192] sm:$0x1]
        %vm220 = vcmask 1043456
        %v221 = vsel %vm220, %v218, -inf
        %v222 = vrot.slane %v221, 4
        %v223 = vmax.f32 %v221, %v222
        %v224 = vrot.slane %v223, 2
        %v225 = vmax.f32 %v223, %v224
        %v226 = vrot.slane %v225, 1
        %v227 = vmax.f32 %v225, %v226
        %v228 = vsub.f32 %v218, %v227
        %v229 = vmul.f32 %v228, 1.442695
        %v230 = vpow.pop %v229
        %v231 = vsel %vm220, %v230, 0.0
        %v232 = vrot.slane %v231, 4
        %v233 = vadd.f32 %v231, %v232
        %v234 = vrot.slane %v233, 2
        %v235 = vadd.f32 %v233, %v234
        %v236 = vrot.slane %v235, 1
        %v237 = vadd.f32 %v235, %v236
        %v238 = vlog2.pop %v237
        %v239 = vmul.f32 %v238, 0.6931472
        %v240 = vadd.f32 %v227, %v239
        %v241 = vlaneseq
        %v242 = vshrl.u32 %v241, 7
        %v243 = vperm.slane %v219, 0
        %vm244 = vcmp.eq.s32.totalorder %v242, %v243
        %v245 = vsel %vm244, %v218, 0.0
        %v246 = vsel %vm220, %v245, 0.0
        %v247 = vrot.slane %v246, 4
        %v248 = vadd.f32 %v246, %v247
        %v249 = vrot.slane %v248, 2
        %v250 = vadd.f32 %v248, %v249
        %v251 = vrot.slane %v250, 1
        %v252 = vadd.f32 %v250, %v251
        %s253 = smul.u32 %s27, 128
        %v254 = vlaneseq
        %v255 = vand.u32 %v254, 127
        %v256 = vstv %s253
        %v257 = vadd.s32 %v256, %v255
        %vm258 = vcmp.ne.s32.totalorder %v219, 4294967295
        %vm259 = vcmp.lt.s32.totalorder %v257, 256
        %vm260 = vmand %vm258, %vm259
        %v261 = vsub.f32 %v240, %v252
        %v262 = vsel %vm260, %v261, 0.0
        %vm263 = vcmask 1040384
        %v264 = vsel %vm263, %v262, 0.0
        %265 = vadd.xlane.f32.xlu0 %v264
        %v266 = vpop.xlane.xlu0 %265
        %v267 = vrot.slane %v266, 4
        %v268 = vadd.f32 %v266, %v267
        %v269 = vrot.slane %v268, 2
        %v270 = vadd.f32 %v268, %v269
        %v271 = vrot.slane %v270, 1
        %v272 = vadd.f32 %v270, %v271
        %s273 = vtos %v272
        %v274 = vsel %vm260, 1, 0
        %v275 = vcvt.s32.f32 %v274
        %v276 = vsel %vm263, %v275, 0.0
        %277 = vadd.xlane.f32.xlu0 %v276
        %v278 = vpop.xlane.xlu0 %277
        %v279 = vrot.slane %v278, 4
        %v280 = vadd.f32 %v278, %v279
        %v281 = vrot.slane %v280, 2
        %v282 = vadd.f32 %v280, %v281
        %v283 = vrot.slane %v282, 1
        %v284 = vadd.f32 %v282, %v283
        %s285 = vtos %v284
        %vm286 = vcmp.eq.s32.totalorder %v242, 0
        %v287 = vstv %s273
        %v288 = vstv %s285
        %v289 = vsel %vm286, %v287, %v288
        %290 = vst [vmem:[%s217] sm:$0x3] %v289
        %s291 = sand.u32 %s100, 1
        %s292 = scalar_lea.sflag [#allocation4], %s291
        %s293 = sand.u32 %s100, 1
        %s294 = smul.addr %s293, 2
        %s295 = scalar_lea.vmem [#allocation7], %s294
        // Predicated region
        $region37: #{tpu_custom_call.1} parent=27 // pred_check
          %p296 = pneg %p110
        $region38: #{tpu_custom_call.1} parent=27 // pred_check_branch
          %298 = sbr.rel (%p296) target = $region40
        $region39: #{tpu_custom_call.1} parent=27 // pred_region
          %300 = vsyncadd %s292, 0
          %s301 = smul.addr %s26, 2
          %s302 = sadd.s32 %s27, %s301
          %s303 = smul.addr %s302, 2
          %s304 = scalar_lea.hbm %s2, %s303
          %s306 = sshll.u32 %s295, 4
          %s307 = int_to_ptr.vmem [resolvable:$true] %s306
          %s308 = sshll.u32 %s304, 4
          %s309 = int_to_ptr.hbm [resolvable:$true] %s308
          %311 = dma.vmem_to_hbm [thread:$0]  %s307, 32, %s309, %s292
        $region40: #{tpu_custom_call.1} parent=27 // pred_fallthru
          _
      $region28: #{tpu_custom_call.1} parent=5 // pred_fallthru
        _
      %p312 = scmp.le.s32.totalorder 2, %s17
      // Predicated region
      $region41: #{tpu_custom_call.1} parent=5 // pred_check
        %p313 = pneg %p312
      $region42: #{tpu_custom_call.1} parent=5 // pred_check_branch
        %315 = sbr.rel (%p313) target = $region44
      $region43: #{tpu_custom_call.1} parent=5 // pred_region
        %s316 = ssub.s32 %s17, 2
        // Predicated region
        $region45: #{tpu_custom_call.1} parent=43 // pred_check
          %p317 = pneg %p116
        $region46: #{tpu_custom_call.1} parent=43 // pred_check_branch
          %319 = sbr.rel (%p317) target = $region48
        $region47: #{tpu_custom_call.1} parent=43 // pred_region
          %s320 = sand.u32 %s101, 1
          %s321 = scalar_lea.sflag [#allocation4], %s320
          %s322 = sand.u32 %s101, 1
          %s323 = smul.addr %s322, 2
          %s324 = scalar_lea.vmem [#allocation7], %s323
          %326 = dma.done %s321, 32
        $region48: #{tpu_custom_call.1} parent=43 // pred_fallthru
          _
      $region44: #{tpu_custom_call.1} parent=5 // pred_fallthru
        _
    $region6: #{tpu_custom_call.1} parent=1 // loop_footer
      %s21 = sadd.s32 1, %s17
    $region7: #{tpu_custom_call.1} parent=1 // loop_footer_branch
      %16 = sbr.rel target = $region3
    $region8: #{tpu_custom_call.1} parent=1 // loop_exit
      _
    %327 = vsyncpa [#allocation3], 1
    %s328 = scalar_lea.sflag [#allocation3], 1
    %329 = vsyncpa %s328, 1
    %330 = vsyncpa [#allocation6], 1
    %s331 = scalar_lea.sflag [#allocation6], 1
    %332 = vsyncpa %s331, 1
    %333 = vsyncpa [#allocation4], 1
    %s334 = scalar_lea.sflag [#allocation4], 1
    %335 = vsyncpa %s334, 1

</llo_original>
